<compile_context>
chip_gen: v5e
topology: v5e:2x2
jax: 0.10.0
libtpu: 0.0.40
codegen_flags: <defaults>
</compile_context>

<pallas_src>
import functools
import math

import jax
import jax.numpy as jnp
from jax.experimental import pallas as pl
from jax.experimental.pallas import tpu as pltpu


# ----------------------------------------------------------------------------
# Single fused kernel: QKV proj + two-piece attention + in-place cache update
# + dense proj
# ----------------------------------------------------------------------------
def _fused_whisper_attn_kernel(len_ref, x_ref, wqkv_ref, bqkv_ref, wd_ref,
                               bd_ref, kc_in, vc_in,
                               ctx_ref, kc_out, vc_out,
                               kp_vmem, vp_vmem, kn_stage, vn_stage, sems,
                               *, num_heads, head_dim):
    nH, dH = num_heads, head_dim
    S = x_ref.shape[0]
    H = nH * dH
    dt = x_ref.dtype                       # model dtype for MXU operands

    cache_len = len_ref[0]                 # number of valid past rows

    # --- kick off the past-cache reads (HBM -> VMEM); they overlap the fused
    # QKV projection below --------------------------------------------------
    rd_k = pltpu.make_async_copy(kc_in, kp_vmem, sems.at[0])
    rd_v = pltpu.make_async_copy(vc_in, vp_vmem, sems.at[1])
    rd_k.start()
    rd_v.start()

    # --- fused QKV projection: one lane-dense (S, 3H) MXU matmul in model
    # dtype with f32 accumulation.  1/norm_factor is already folded into the
    # Q columns of wqkv/bqkv, and the K bias segment is zero (bias=False). ---
    qkv = jnp.dot(x_ref[...], wqkv_ref[...],
                  preferred_element_type=jnp.float32)
    qkv = qkv + bqkv_ref[...].astype(jnp.float32)          # (S, 3H) f32

    q2d = qkv[:, 0 * H:1 * H].astype(dt)   # (S, H), pre-scaled
    kn2d = qkv[:, 1 * H:2 * H].astype(dt)  # (S, H)
    vn2d = qkv[:, 2 * H:3 * H].astype(dt)  # (S, H)

    # past cache must be resident before we use it (and before we overwrite
    # the tail rows of the aliased HBM buffer).
    rd_k.wait()
    rd_v.wait()

    # --- in-place cache update: stage the new K/V rows as lane-dense (S, H)
    # slabs and DMA only those S rows into the aliased HBM cache at row
    # offset cache_len.  The writeback overlaps the attention math below. ---
    kn_stage[...] = kn2d.astype(kn_stage.dtype)
    vn_stage[...] = vn2d.astype(vn_stage.dtype)
    wr_k = pltpu.make_async_copy(kn_stage, kc_out.at[pl.ds(cache_len, S)],
                                 sems.at[2])
    wr_v = pltpu.make_async_copy(vn_stage, vc_out.at[pl.ds(cache_len, S)],
                                 sems.at[3])
    wr_k.start()
    wr_v.start()

    kp2d = kp_vmem[...].astype(dt)         # (T_max, H)
    vp2d = vp_vmem[...].astype(dt)

    # --- head split via value-level stacks (no masked scratch stores); all
    # heads go through one batched matmul per piece. -------------------------
    def heads(x):                           # (rows, H) -> (nH, rows, dH)
        return jnp.stack([x[:, h * dH:(h + 1) * dH] for h in range(nH)],
                         axis=0)

    qh, knh, vnh = heads(q2d), heads(kn2d), heads(vn2d)
    kph, vph = heads(kp2d), heads(vp2d)

    sp = jnp.einsum('hqd,hkd->hqk', qh, kph,
                    preferred_element_type=jnp.float32)     # (nH, S, T_max)
    sn = jnp.einsum('hqd,hkd->hqk', qh, knh,
                    preferred_element_type=jnp.float32)     # (nH, S, S)

    # mask past columns beyond the valid cache length (runtime scalar)
    col = jax.lax.broadcasted_iota(jnp.int32, sp.shape, 2)
    sp = jnp.where(col < cache_len, sp, -1e30)

    m = jnp.maximum(jnp.max(sp, axis=-1, keepdims=True),
                    jnp.max(sn, axis=-1, keepdims=True))
    pp = jnp.exp(sp - m)
    pn = jnp.exp(sn - m)
    inv = pl.reciprocal(jnp.sum(pp, axis=-1, keepdims=True)
                        + jnp.sum(pn, axis=-1, keepdims=True), approx=True)
    pp = (pp * inv).astype(dt)
    pn = (pn * inv).astype(dt)

    ctx = (jnp.einsum('hqk,hkd->hqd', pp, vph,
                      preferred_element_type=jnp.float32)
           + jnp.einsum('hqk,hkd->hqd', pn, vnh,
                        preferred_element_type=jnp.float32))  # (nH, S, dH)

    # merge heads back into one lane-dense (S, H) slab (single value concat)
    ctx2d = jnp.concatenate([ctx[h] for h in range(nH)], axis=-1)

    out = jnp.dot(ctx2d.astype(dt), wd_ref[...],
                  preferred_element_type=jnp.float32)
    out = out + bd_ref[...].astype(jnp.float32)
    ctx_ref[...] = out.astype(ctx_ref.dtype)

    # make sure the cache writeback has landed before the kernel returns
    wr_k.wait()
    wr_v.wait()


def fused_whisper_decoder_attention(x2d, wqkv, bqkv, wd, bd,
                                    k_cache, v_cache, cache_len,
                                    *, num_heads, head_dim):
    """x2d: [S, H]; wqkv: [H, 3H] (1/norm_factor folded into Q cols);
    bqkv: [1, 3H]; wd/bd: dense proj; k_cache/v_cache: lane-dense [T_max, H]
    fixed-size caches updated in place (aliased); cache_len: [1] int32 valid
    past rows.  Returns (context [S, H], k_cache' [T_max, H], v_cache')."""
    S, H = x2d.shape
    nH, dH = num_heads, head_dim
    assert H == nH * dH
    T_max = k_cache.shape[0]
    assert v_cache.shape[0] == T_max

    kernel = functools.partial(_fused_whisper_attn_kernel,
                               num_heads=nH, head_dim=dH)
    vmem = pl.BlockSpec(memory_space=pltpu.MemorySpace.VMEM)
    smem = pl.BlockSpec(memory_space=pltpu.MemorySpace.SMEM)
    anysp = pl.BlockSpec(memory_space=pl.ANY)

    return pl.pallas_call(
        kernel,
        out_shape=(
            jax.ShapeDtypeStruct((S, H), x2d.dtype),
            jax.ShapeDtypeStruct((T_max, H), k_cache.dtype),
            jax.ShapeDtypeStruct((T_max, H), v_cache.dtype),
        ),
        in_specs=[smem, vmem, vmem, vmem, vmem, vmem, anysp, anysp],
        out_specs=(vmem, anysp, anysp),
        scratch_shapes=[
            pltpu.VMEM((T_max, H), k_cache.dtype),   # past K copy
            pltpu.VMEM((T_max, H), v_cache.dtype),   # past V copy
            pltpu.VMEM((S, H), k_cache.dtype),       # new-K staging (lane-dense)
            pltpu.VMEM((S, H), v_cache.dtype),       # new-V staging (lane-dense)
            pltpu.SemaphoreType.DMA((4,)),
        ],
        # in-place cache update: k_cache -> out 1, v_cache -> out 2
        input_output_aliases={6: 1, 7: 2},
        compiler_params=pltpu.CompilerParams(
            vmem_limit_bytes=48 * 1024 * 1024),
    )(cache_len, x2d, wqkv, bqkv, wd, bd, k_cache, v_cache)


# ----------------------------------------------------------------------------
# Module-equivalent wrapper
# ----------------------------------------------------------------------------
class WhisperDecoderAttentionPallas:
    def __init__(self, hidden_size=32, num_attention_heads=4,
                 apply_query_key_layer_scaling=False, num_layers=1,
                 dtype=jnp.float32, key=None):
        assert hidden_size % num_attention_heads == 0
        self.hidden_size = hidden_size
        self.num_attention_heads = num_attention_heads
        self.attention_head_size = hidden_size // num_attention_heads
        self.norm_factor = math.sqrt(self.attention_head_size)
        if apply_query_key_layer_scaling:
            self.norm_factor *= num_layers
        self.dtype = dtype

        # Deterministic synthetic parameter init.
        if key is None:
            key = jax.random.PRNGKey(0)
        ks = jax.random.split(key, 7)
        H = hidden_size
        scale = 1.0 / math.sqrt(H)
        self.wq = (jax.random.normal(ks[0], (H, H)) * scale).astype(dtype)
        self.bq = (jax.random.normal(ks[1], (1, H)) * scale).astype(dtype)
        self.wk = (jax.random.normal(ks[2], (H, H)) * scale).astype(dtype)
        self.wv = (jax.random.normal(ks[3], (H, H)) * scale).astype(dtype)
        self.bv = (jax.random.normal(ks[4], (1, H)) * scale).astype(dtype)
        self.wd = (jax.random.normal(ks[5], (H, H)) * scale).astype(dtype)
        self.bd = (jax.random.normal(ks[6], (1, H)) * scale).astype(dtype)

        # Fused QKV weight/bias (one weight DMA, one MXU matmul in-kernel)
        # with 1/norm_factor folded into the Q columns (free at init).
        # k_proj has bias=False -> zero bias segment for K.
        inv_norm = 1.0 / self.norm_factor
        self.wqkv = jnp.concatenate(
            [(self.wq.astype(jnp.float32) * inv_norm).astype(dtype),
             self.wk, self.wv], axis=1)
        self.bqkv = jnp.concatenate(
            [(self.bq.astype(jnp.float32) * inv_norm).astype(dtype),
             jnp.zeros((1, H), dtype), self.bv], axis=1)

    def __call__(self, hidden_states, past_key, past_value, cache_mask):
        """Self-attention branch (key_value_states is None).

        hidden_states: [B, S, H] (B must be 1, as in the reference decoder)
        past_key/past_value: [1, nH, P, dH]
        cache_mask: 1-D tensor; only its length matters here (static shapes),
                    but the kernel itself takes the length as a runtime scalar.
        Returns (context [B, S, H], key [1, nH, T, dH], value [1, nH, T, dH]).

        NOTE: for a real decode loop, call fused_whisper_decoder_attention
        directly with a persistent lane-dense [T_max, H] cache so the in-place
        aliased update never converts layout; this wrapper only presents the
        reference module's [1, nH, T, dH] API.
        """
        B, S, H = hidden_states.shape
        assert B == 1, "reference decoder path slices the cache with batch 1"
        nH, dH = self.num_attention_heads, self.attention_head_size

        # cache_length = min(shape(cache_mask, 0) - 1, shape(past_key, 2));
        # depends only on shapes, so it is a static Python int here.
        P = min(cache_mask.shape[0] - 1, past_key.shape[2])

        # Build lane-dense fixed-size caches with room for the S new rows.
        pk2d = past_key[0, :, :P, :].transpose(1, 0, 2).reshape(P, H)
        pv2d = past_value[0, :, :P, :].transpose(1, 0, 2).reshape(P, H)
        k_cache = jnp.concatenate(
            [pk2d, jnp.zeros((S, H), past_key.dtype)], axis=0)
        v_cache = jnp.concatenate(
            [pv2d, jnp.zeros((S, H), past_value.dtype)], axis=0)
        cache_len = jnp.array([P], jnp.int32)

        ctx, k_cache, v_cache = fused_whisper_decoder_attention(
            hidden_states.reshape(S, H).astype(self.dtype),
            self.wqkv, self.bqkv, self.wd, self.bd,
            k_cache, v_cache, cache_len,
            num_heads=nH, head_dim=dH)

        context = ctx.reshape(B, S, H)
        T = P + S
        key_states = k_cache[:T].reshape(T, nH, dH).transpose(1, 0, 2)[None]
        value_states = v_cache[:T].reshape(T, nH, dH).transpose(1, 0, 2)[None]
        # TODO(synk): RaggedTensor row_lengths / max_row_length are metadata
        # passthrough (no compute); the dense tensor is returned.
        return context, key_states, value_states


if __name__ == "__main__":
    B, S, H, nH, P = 1, 8, 32, 4, 8          # batch, seq, hidden, heads, past
    dH = H // nH

    root = jax.random.PRNGKey(0)
    pkey, dkey = jax.random.split(root)

    attn = WhisperDecoderAttentionPallas(hidden_size=H, num_attention_heads=nH,
                                         dtype=jnp.float32, key=pkey)

    k0, k1, k2 = jax.random.split(dkey, 3)
    hidden_states = jax.random.normal(k0, (B, S, H), jnp.float32)
    past_key = jax.random.normal(k1, (1, nH, P, dH), jnp.float32)
    past_value = jax.random.normal(k2, (1, nH, P, dH), jnp.float32)
    cache_mask = jnp.ones((P + 1,), jnp.int32)   # cache_length = P

    fwd = jax.jit(lambda h, pk, pv, cm: attn(h, pk, pv, cm))
    context, new_key, new_value = fwd(hidden_states, past_key, past_value,
                                      cache_mask)
    jax.block_until_ready((context, new_key, new_value))

    # ---- pure-JAX reference (same math as the PyTorch module) --------------
    x2d = hidden_states.reshape(B * S, H)
    q_r = (x2d @ attn.wq + attn.bq).reshape(S, nH, dH).transpose(1, 0, 2)
    k_r = (x2d @ attn.wk).reshape(S, nH, dH).transpose(1, 0, 2)   # no bias
    v_r = (x2d @ attn.wv + attn.bv).reshape(S, nH, dH).transpose(1, 0, 2)
    k_full = jnp.concatenate([past_key[0], k_r], axis=1)
    v_full = jnp.concatenate([past_value[0], v_r], axis=1)
    scores_r = jnp.einsum('hqd,hkd->hqk', q_r, k_full) / attn.norm_factor
    probs_r = jax.nn.softmax(scores_r, axis=-1)
    ctx_r = jnp.einsum('hqk,hkd->hqd', probs_r, v_full)
    ctx_r = ctx_r.transpose(1, 0, 2).reshape(S, H)
    ctx_r = (ctx_r @ attn.wd + attn.bd).reshape(B, S, H)

    assert context.shape == (B, S, H)
    assert new_key.shape == (1, nH, P + S, dH)
    assert new_value.shape == (1, nH, P + S, dH)
    assert jnp.allclose(context, ctx_r, atol=2e-2, rtol=2e-2)
    assert jnp.allclose(new_key[0, :, :P], past_key[0])
    assert jnp.allclose(new_value[0, :, :P], past_value[0])
    assert jnp.allclose(new_key[0, :, P:], k_r, atol=1e-4, rtol=1e-4)
    assert jnp.allclose(new_value[0, :, P:], v_r, atol=1e-4, rtol=1e-4)
    print("KERNEL_OK")
</pallas_src>

<mosaic_0001>
module attributes {stable_mosaic.version = 11 : i64} {
  func.func @_fused_whisper_attn_kernel(%arg0: memref<1xi32, #tpu.memory_space<smem>>, %arg1: memref<8x32xf32, #tpu.memory_space<vmem>>, %arg2: memref<32x96xf32, #tpu.memory_space<vmem>>, %arg3: memref<1x96xf32, #tpu.memory_space<vmem>>, %arg4: memref<32x32xf32, #tpu.memory_space<vmem>>, %arg5: memref<1x32xf32, #tpu.memory_space<vmem>>, %arg6: memref<16x32xf32, #tpu.memory_space<any>>, %arg7: memref<16x32xf32, #tpu.memory_space<any>>, %arg8: memref<8x32xf32, #tpu.memory_space<vmem>>, %arg9: memref<16x32xf32, #tpu.memory_space<any>>, %arg10: memref<16x32xf32, #tpu.memory_space<any>>, %arg11: memref<16x32xf32, #tpu.memory_space<vmem>>, %arg12: memref<16x32xf32, #tpu.memory_space<vmem>>, %arg13: memref<8x32xf32, #tpu.memory_space<vmem>>, %arg14: memref<8x32xf32, #tpu.memory_space<vmem>>, %arg15: memref<4x!tpu.dma_semaphore, #tpu.memory_space<semaphore_mem>>) attributes {dimension_semantics = [], scalar_prefetch = 0 : i64, scratch_operands = 5 : i64, tpu.core_type = #tpu.core_type<tc>} {
    %c0 = arith.constant 0 : index
    %0 = memref.load %arg0[%c0] : memref<1xi32, #tpu.memory_space<smem>>
    %c0_i32 = arith.constant 0 : i32
    %1 = tpu.memref_slice %arg15[%c0_i32] : memref<4x!tpu.dma_semaphore, #tpu.memory_space<semaphore_mem>> -> memref<1x!tpu.dma_semaphore, #tpu.memory_space<semaphore_mem>>
    %2 = tpu.memref_squeeze %1 : memref<1x!tpu.dma_semaphore, #tpu.memory_space<semaphore_mem>> -> memref<!tpu.dma_semaphore, #tpu.memory_space<semaphore_mem>>
    tpu.enqueue_dma source(%arg6 : memref<16x32xf32, #tpu.memory_space<any>>) target(%arg11 : memref<16x32xf32, #tpu.memory_space<vmem>>) target_semaphore(%2 : memref<!tpu.dma_semaphore, #tpu.memory_space<semaphore_mem>>)
    %c1_i32 = arith.constant 1 : i32
    %3 = tpu.memref_slice %arg15[%c1_i32] : memref<4x!tpu.dma_semaphore, #tpu.memory_space<semaphore_mem>> -> memref<1x!tpu.dma_semaphore, #tpu.memory_space<semaphore_mem>>
    %4 = tpu.memref_squeeze %3 : memref<1x!tpu.dma_semaphore, #tpu.memory_space<semaphore_mem>> -> memref<!tpu.dma_semaphore, #tpu.memory_space<semaphore_mem>>
    tpu.enqueue_dma source(%arg7 : memref<16x32xf32, #tpu.memory_space<any>>) target(%arg12 : memref<16x32xf32, #tpu.memory_space<vmem>>) target_semaphore(%4 : memref<!tpu.dma_semaphore, #tpu.memory_space<semaphore_mem>>)
    %c0_0 = arith.constant 0 : index
    %c0_1 = arith.constant 0 : index
    %5 = vector.load %arg1[%c0_0, %c0_1] : memref<8x32xf32, #tpu.memory_space<vmem>>, vector<8x32xf32>
    %c0_2 = arith.constant 0 : index
    %c0_3 = arith.constant 0 : index
    %6 = vector.load %arg2[%c0_2, %c0_3] : memref<32x96xf32, #tpu.memory_space<vmem>>, vector<32x96xf32>
    %cst = arith.constant dense<0.000000e+00> : vector<8x96xf32>
    %7 = tpu.matmul %5, %6, %cst {dimension_numbers = #tpu.dot_dimension_numbers<[1], [0], [0], [1], [0, 0, 1, 1], [], []>} : vector<8x32xf32>, vector<32x96xf32>, vector<8x96xf32> -> vector<8x96xf32>
    %c0_4 = arith.constant 0 : index
    %c0_5 = arith.constant 0 : index
    %8 = vector.load %arg3[%c0_4, %c0_5] : memref<1x96xf32, #tpu.memory_space<vmem>>, vector<1x96xf32>
    %9 = vector.broadcast %8 : vector<1x96xf32> to vector<8x96xf32>
    %10 = arith.addf %7, %9 : vector<8x96xf32>
    %11 = vector.extract_strided_slice %10 {offsets = [0, 0], sizes = [8, 32], strides = [1, 1]} : vector<8x96xf32> to vector<8x32xf32>
    %12 = vector.extract_strided_slice %10 {offsets = [0, 32], sizes = [8, 32], strides = [1, 1]} : vector<8x96xf32> to vector<8x32xf32>
    %13 = vector.extract_strided_slice %10 {offsets = [0, 64], sizes = [8, 32], strides = [1, 1]} : vector<8x96xf32> to vector<8x32xf32>
    %c0_i32_6 = arith.constant 0 : i32
    %14 = tpu.memref_slice %arg15[%c0_i32_6] : memref<4x!tpu.dma_semaphore, #tpu.memory_space<semaphore_mem>> -> memref<1x!tpu.dma_semaphore, #tpu.memory_space<semaphore_mem>>
    %15 = tpu.memref_squeeze %14 : memref<1x!tpu.dma_semaphore, #tpu.memory_space<semaphore_mem>> -> memref<!tpu.dma_semaphore, #tpu.memory_space<semaphore_mem>>
    tpu.wait_dma2 semaphore(%15 : memref<!tpu.dma_semaphore, #tpu.memory_space<semaphore_mem>>) src(%arg6 : memref<16x32xf32, #tpu.memory_space<any>>) dst(%arg11 : memref<16x32xf32, #tpu.memory_space<vmem>>)
    %c1_i32_7 = arith.constant 1 : i32
    %16 = tpu.memref_slice %arg15[%c1_i32_7] : memref<4x!tpu.dma_semaphore, #tpu.memory_space<semaphore_mem>> -> memref<1x!tpu.dma_semaphore, #tpu.memory_space<semaphore_mem>>
    %17 = tpu.memref_squeeze %16 : memref<1x!tpu.dma_semaphore, #tpu.memory_space<semaphore_mem>> -> memref<!tpu.dma_semaphore, #tpu.memory_space<semaphore_mem>>
    tpu.wait_dma2 semaphore(%17 : memref<!tpu.dma_semaphore, #tpu.memory_space<semaphore_mem>>) src(%arg7 : memref<16x32xf32, #tpu.memory_space<any>>) dst(%arg12 : memref<16x32xf32, #tpu.memory_space<vmem>>)
    %c0_8 = arith.constant 0 : index
    %c0_9 = arith.constant 0 : index
    %18 = vector.load %arg13[%c0_8, %c0_9] : memref<8x32xf32, #tpu.memory_space<vmem>>, vector<8x32xf32>
    tpu.vector_store %arg13[%c0_8, %c0_9], %12 {strides = array<i32>} : memref<8x32xf32, #tpu.memory_space<vmem>>, vector<8x32xf32>,
    %c0_10 = arith.constant 0 : index
    %c0_11 = arith.constant 0 : index
    %19 = vector.load %arg14[%c0_10, %c0_11] : memref<8x32xf32, #tpu.memory_space<vmem>>, vector<8x32xf32>
    tpu.vector_store %arg14[%c0_10, %c0_11], %13 {strides = array<i32>} : memref<8x32xf32, #tpu.memory_space<vmem>>, vector<8x32xf32>,
    %c2_i32 = arith.constant 2 : i32
    %c0_i32_12 = arith.constant 0 : i32
    %20 = tpu.memref_slice %arg9[%0, %c0_i32_12] : memref<16x32xf32, #tpu.memory_space<any>> -> memref<8x32xf32, #tpu.memory_space<any>>
    %21 = tpu.memref_slice %arg15[%c2_i32] : memref<4x!tpu.dma_semaphore, #tpu.memory_space<semaphore_mem>> -> memref<1x!tpu.dma_semaphore, #tpu.memory_space<semaphore_mem>>
    %22 = tpu.memref_squeeze %21 : memref<1x!tpu.dma_semaphore, #tpu.memory_space<semaphore_mem>> -> memref<!tpu.dma_semaphore, #tpu.memory_space<semaphore_mem>>
    tpu.enqueue_dma source(%arg13 : memref<8x32xf32, #tpu.memory_space<vmem>>) target(%20 : memref<8x32xf32, #tpu.memory_space<any>>) target_semaphore(%22 : memref<!tpu.dma_semaphore, #tpu.memory_space<semaphore_mem>>)
    %c3_i32 = arith.constant 3 : i32
    %c0_i32_13 = arith.constant 0 : i32
    %23 = tpu.memref_slice %arg10[%0, %c0_i32_13] : memref<16x32xf32, #tpu.memory_space<any>> -> memref<8x32xf32, #tpu.memory_space<any>>
    %24 = tpu.memref_slice %arg15[%c3_i32] : memref<4x!tpu.dma_semaphore, #tpu.memory_space<semaphore_mem>> -> memref<1x!tpu.dma_semaphore, #tpu.memory_space<semaphore_mem>>
    %25 = tpu.memref_squeeze %24 : memref<1x!tpu.dma_semaphore, #tpu.memory_space<semaphore_mem>> -> memref<!tpu.dma_semaphore, #tpu.memory_space<semaphore_mem>>
    tpu.enqueue_dma source(%arg14 : memref<8x32xf32, #tpu.memory_space<vmem>>) target(%23 : memref<8x32xf32, #tpu.memory_space<any>>) target_semaphore(%25 : memref<!tpu.dma_semaphore, #tpu.memory_space<semaphore_mem>>)
    %c0_14 = arith.constant 0 : index
    %c0_15 = arith.constant 0 : index
    %26 = vector.load %arg11[%c0_14, %c0_15] : memref<16x32xf32, #tpu.memory_space<vmem>>, vector<16x32xf32>
    %c0_16 = arith.constant 0 : index
    %c0_17 = arith.constant 0 : index
    %27 = vector.load %arg12[%c0_16, %c0_17] : memref<16x32xf32, #tpu.memory_space<vmem>>, vector<16x32xf32>
    %28 = vector.extract_strided_slice %11 {offsets = [0, 0], sizes = [8, 8], strides = [1, 1]} : vector<8x32xf32> to vector<8x8xf32>
    %29 = vector.extract_strided_slice %11 {offsets = [0, 8], sizes = [8, 8], strides = [1, 1]} : vector<8x32xf32> to vector<8x8xf32>
    %30 = vector.extract_strided_slice %11 {offsets = [0, 16], sizes = [8, 8], strides = [1, 1]} : vector<8x32xf32> to vector<8x8xf32>
    %31 = vector.extract_strided_slice %11 {offsets = [0, 24], sizes = [8, 8], strides = [1, 1]} : vector<8x32xf32> to vector<8x8xf32>
    %32 = vector.shape_cast %28 : vector<8x8xf32> to vector<1x8x8xf32>
    %33 = vector.shape_cast %29 : vector<8x8xf32> to vector<1x8x8xf32>
    %34 = vector.shape_cast %30 : vector<8x8xf32> to vector<1x8x8xf32>
    %35 = vector.shape_cast %31 : vector<8x8xf32> to vector<1x8x8xf32>
    %36 = tpu.concatenate %32, %33, %34, %35 in 0 : vector<1x8x8xf32>, vector<1x8x8xf32>, vector<1x8x8xf32>, vector<1x8x8xf32> -> vector<4x8x8xf32>
    %37 = vector.extract_strided_slice %12 {offsets = [0, 0], sizes = [8, 8], strides = [1, 1]} : vector<8x32xf32> to vector<8x8xf32>
    %38 = vector.extract_strided_slice %12 {offsets = [0, 8], sizes = [8, 8], strides = [1, 1]} : vector<8x32xf32> to vector<8x8xf32>
    %39 = vector.extract_strided_slice %12 {offsets = [0, 16], sizes = [8, 8], strides = [1, 1]} : vector<8x32xf32> to vector<8x8xf32>
    %40 = vector.extract_strided_slice %12 {offsets = [0, 24], sizes = [8, 8], strides = [1, 1]} : vector<8x32xf32> to vector<8x8xf32>
    %41 = vector.shape_cast %37 : vector<8x8xf32> to vector<1x8x8xf32>
    %42 = vector.shape_cast %38 : vector<8x8xf32> to vector<1x8x8xf32>
    %43 = vector.shape_cast %39 : vector<8x8xf32> to vector<1x8x8xf32>
    %44 = vector.shape_cast %40 : vector<8x8xf32> to vector<1x8x8xf32>
    %45 = tpu.concatenate %41, %42, %43, %44 in 0 : vector<1x8x8xf32>, vector<1x8x8xf32>, vector<1x8x8xf32>, vector<1x8x8xf32> -> vector<4x8x8xf32>
    %46 = vector.extract_strided_slice %13 {offsets = [0, 0], sizes = [8, 8], strides = [1, 1]} : vector<8x32xf32> to vector<8x8xf32>
    %47 = vector.extract_strided_slice %13 {offsets = [0, 8], sizes = [8, 8], strides = [1, 1]} : vector<8x32xf32> to vector<8x8xf32>
    %48 = vector.extract_strided_slice %13 {offsets = [0, 16], sizes = [8, 8], strides = [1, 1]} : vector<8x32xf32> to vector<8x8xf32>
    %49 = vector.extract_strided_slice %13 {offsets = [0, 24], sizes = [8, 8], strides = [1, 1]} : vector<8x32xf32> to vector<8x8xf32>
    %50 = vector.shape_cast %46 : vector<8x8xf32> to vector<1x8x8xf32>
    %51 = vector.shape_cast %47 : vector<8x8xf32> to vector<1x8x8xf32>
    %52 = vector.shape_cast %48 : vector<8x8xf32> to vector<1x8x8xf32>
    %53 = vector.shape_cast %49 : vector<8x8xf32> to vector<1x8x8xf32>
    %54 = tpu.concatenate %50, %51, %52, %53 in 0 : vector<1x8x8xf32>, vector<1x8x8xf32>, vector<1x8x8xf32>, vector<1x8x8xf32> -> vector<4x8x8xf32>
    %55 = vector.extract_strided_slice %26 {offsets = [0, 0], sizes = [16, 8], strides = [1, 1]} : vector<16x32xf32> to vector<16x8xf32>
    %56 = vector.extract_strided_slice %26 {offsets = [0, 8], sizes = [16, 8], strides = [1, 1]} : vector<16x32xf32> to vector<16x8xf32>
    %57 = vector.extract_strided_slice %26 {offsets = [0, 16], sizes = [16, 8], strides = [1, 1]} : vector<16x32xf32> to vector<16x8xf32>
    %58 = vector.extract_strided_slice %26 {offsets = [0, 24], sizes = [16, 8], strides = [1, 1]} : vector<16x32xf32> to vector<16x8xf32>
    %59 = vector.shape_cast %55 : vector<16x8xf32> to vector<1x16x8xf32>
    %60 = vector.shape_cast %56 : vector<16x8xf32> to vector<1x16x8xf32>
    %61 = vector.shape_cast %57 : vector<16x8xf32> to vector<1x16x8xf32>
    %62 = vector.shape_cast %58 : vector<16x8xf32> to vector<1x16x8xf32>
    %63 = tpu.concatenate %59, %60, %61, %62 in 0 : vector<1x16x8xf32>, vector<1x16x8xf32>, vector<1x16x8xf32>, vector<1x16x8xf32> -> vector<4x16x8xf32>
    %64 = vector.extract_strided_slice %27 {offsets = [0, 0], sizes = [16, 8], strides = [1, 1]} : vector<16x32xf32> to vector<16x8xf32>
    %65 = vector.extract_strided_slice %27 {offsets = [0, 8], sizes = [16, 8], strides = [1, 1]} : vector<16x32xf32> to vector<16x8xf32>
    %66 = vector.extract_strided_slice %27 {offsets = [0, 16], sizes = [16, 8], strides = [1, 1]} : vector<16x32xf32> to vector<16x8xf32>
    %67 = vector.extract_strided_slice %27 {offsets = [0, 24], sizes = [16, 8], strides = [1, 1]} : vector<16x32xf32> to vector<16x8xf32>
    %68 = vector.shape_cast %64 : vector<16x8xf32> to vector<1x16x8xf32>
    %69 = vector.shape_cast %65 : vector<16x8xf32> to vector<1x16x8xf32>
    %70 = vector.shape_cast %66 : vector<16x8xf32> to vector<1x16x8xf32>
    %71 = vector.shape_cast %67 : vector<16x8xf32> to vector<1x16x8xf32>
    %72 = tpu.concatenate %68, %69, %70, %71 in 0 : vector<1x16x8xf32>, vector<1x16x8xf32>, vector<1x16x8xf32>, vector<1x16x8xf32> -> vector<4x16x8xf32>
    "tpu.trace_start"() <{level = 10 : i32, message = "hqd,hkd->hqk"}> : () -> ()
    %cst_18 = arith.constant dense<0.000000e+00> : vector<4x8x16xf32>
    %73 = tpu.matmul %36, %63, %cst_18 {dimension_numbers = #tpu.dot_dimension_numbers<[2], [2], [1], [1], [0, 0, 0, 1, 1, 1], [0], [0]>} : vector<4x8x8xf32>, vector<4x16x8xf32>, vector<4x8x16xf32> -> vector<4x8x16xf32>
    %cst_19 = arith.constant dense<0.000000e+00> : vector<4x8x8xf32>
    %74 = tpu.matmul %36, %45, %cst_19 {dimension_numbers = #tpu.dot_dimension_numbers<[2], [2], [1], [1], [0, 0, 0, 1, 1, 1], [0], [0]>} : vector<4x8x8xf32>, vector<4x8x8xf32>, vector<4x8x8xf32> -> vector<4x8x8xf32>
    "tpu.trace_stop"() : () -> ()
    %75 = tpu.iota {dimensions = array<i32: 2>} : vector<4x8x16xi32>
    %76 = vector.broadcast %0 : i32 to vector<4x8x16xi32>
    %77 = arith.cmpi slt, %75, %76 : vector<4x8x16xi32>
    %cst_20 = arith.constant -1.000000e+30 : f32
    %78 = vector.broadcast %cst_20 : f32 to vector<4x8x16xf32>
    %79 = arith.select %77, %73, %78 : vector<4x8x16xi1>, vector<4x8x16xf32>
    %cst_21 = arith.constant dense<0xFF800000> : vector<4x8xf32>
    %80 = vector.multi_reduction <maximumf>, %79, %cst_21 [2] : vector<4x8x16xf32> to vector<4x8xf32>
    %81 = vector.shape_cast %80 : vector<4x8xf32> to vector<4x8x1xf32>
    %cst_22 = arith.constant dense<0xFF800000> : vector<4x8xf32>
    %82 = vector.multi_reduction <maximumf>, %74, %cst_22 [2] : vector<4x8x8xf32> to vector<4x8xf32>
    %83 = vector.shape_cast %82 : vector<4x8xf32> to vector<4x8x1xf32>
    %84 = arith.maximumf %81, %83 : vector<4x8x1xf32>
    %85 = vector.broadcast %84 : vector<4x8x1xf32> to vector<4x8x16xf32>
    %86 = arith.subf %79, %85 : vector<4x8x16xf32>
    %87 = math.exp %86 : vector<4x8x16xf32>
    %88 = vector.broadcast %84 : vector<4x8x1xf32> to vector<4x8x8xf32>
    %89 = arith.subf %74, %88 : vector<4x8x8xf32>
    %90 = math.exp %89 : vector<4x8x8xf32>
    %cst_23 = arith.constant dense<0.000000e+00> : vector<4x8xf32>
    %91 = vector.multi_reduction <add>, %87, %cst_23 [2] : vector<4x8x16xf32> to vector<4x8xf32>
    %92 = vector.shape_cast %91 : vector<4x8xf32> to vector<4x8x1xf32>
    %cst_24 = arith.constant dense<0.000000e+00> : vector<4x8xf32>
    %93 = vector.multi_reduction <add>, %90, %cst_24 [2] : vector<4x8x8xf32> to vector<4x8xf32>
    %94 = vector.shape_cast %93 : vector<4x8xf32> to vector<4x8x1xf32>
    %95 = arith.addf %92, %94 : vector<4x8x1xf32>
    %96 = tpu.reciprocal %95 {approx = true} : vector<4x8x1xf32> -> vector<4x8x1xf32>
    %97 = vector.broadcast %96 : vector<4x8x1xf32> to vector<4x8x16xf32>
    %98 = arith.mulf %87, %97 : vector<4x8x16xf32>
    %99 = vector.broadcast %96 : vector<4x8x1xf32> to vector<4x8x8xf32>
    %100 = arith.mulf %90, %99 : vector<4x8x8xf32>
    "tpu.trace_start"() <{level = 10 : i32, message = "hqk,hkd->hqd"}> : () -> ()
    %cst_25 = arith.constant dense<0.000000e+00> : vector<4x8x8xf32>
    %101 = tpu.matmul %98, %72, %cst_25 {dimension_numbers = #tpu.dot_dimension_numbers<[2], [1], [1], [2], [0, 0, 0, 1, 1, 2], [0], [0]>} : vector<4x8x16xf32>, vector<4x16x8xf32>, vector<4x8x8xf32> -> vector<4x8x8xf32>
    %cst_26 = arith.constant dense<0.000000e+00> : vector<4x8x8xf32>
    %102 = tpu.matmul %100, %54, %cst_26 {dimension_numbers = #tpu.dot_dimension_numbers<[2], [1], [1], [2], [0, 0, 0, 1, 1, 2], [0], [0]>} : vector<4x8x8xf32>, vector<4x8x8xf32>, vector<4x8x8xf32> -> vector<4x8x8xf32>
    "tpu.trace_stop"() : () -> ()
    %103 = arith.addf %101, %102 : vector<4x8x8xf32>
    %104 = vector.extract_strided_slice %103 {offsets = [0, 0, 0], sizes = [1, 8, 8], strides = [1, 1, 1]} : vector<4x8x8xf32> to vector<1x8x8xf32>
    %105 = vector.shape_cast %104 : vector<1x8x8xf32> to vector<8x8xf32>
    %106 = vector.extract_strided_slice %103 {offsets = [1, 0, 0], sizes = [1, 8, 8], strides = [1, 1, 1]} : vector<4x8x8xf32> to vector<1x8x8xf32>
    %107 = vector.shape_cast %106 : vector<1x8x8xf32> to vector<8x8xf32>
    %108 = vector.extract_strided_slice %103 {offsets = [2, 0, 0], sizes = [1, 8, 8], strides = [1, 1, 1]} : vector<4x8x8xf32> to vector<1x8x8xf32>
    %109 = vector.shape_cast %108 : vector<1x8x8xf32> to vector<8x8xf32>
    %110 = vector.extract_strided_slice %103 {offsets = [3, 0, 0], sizes = [1, 8, 8], strides = [1, 1, 1]} : vector<4x8x8xf32> to vector<1x8x8xf32>
    %111 = vector.shape_cast %110 : vector<1x8x8xf32> to vector<8x8xf32>
    %112 = tpu.concatenate %105, %107, %109, %111 in 1 : vector<8x8xf32>, vector<8x8xf32>, vector<8x8xf32>, vector<8x8xf32> -> vector<8x32xf32>
    %c0_27 = arith.constant 0 : index
    %c0_28 = arith.constant 0 : index
    %113 = vector.load %arg4[%c0_27, %c0_28] : memref<32x32xf32, #tpu.memory_space<vmem>>, vector<32x32xf32>
    %cst_29 = arith.constant dense<0.000000e+00> : vector<8x32xf32>
    %114 = tpu.matmul %112, %113, %cst_29 {dimension_numbers = #tpu.dot_dimension_numbers<[1], [0], [0], [1], [0, 0, 1, 1], [], []>} : vector<8x32xf32>, vector<32x32xf32>, vector<8x32xf32> -> vector<8x32xf32>
    %c0_30 = arith.constant 0 : index
    %c0_31 = arith.constant 0 : index
    %115 = vector.load %arg5[%c0_30, %c0_31] : memref<1x32xf32, #tpu.memory_space<vmem>>, vector<1x32xf32>
    %116 = vector.broadcast %115 : vector<1x32xf32> to vector<8x32xf32>
    %117 = arith.addf %114, %116 : vector<8x32xf32>
    %c0_32 = arith.constant 0 : index
    %c0_33 = arith.constant 0 : index
    %118 = vector.load %arg8[%c0_32, %c0_33] : memref<8x32xf32, #tpu.memory_space<vmem>>, vector<8x32xf32>
    tpu.vector_store %arg8[%c0_32, %c0_33], %117 {strides = array<i32>} : memref<8x32xf32, #tpu.memory_space<vmem>>, vector<8x32xf32>,
    %c2_i32_34 = arith.constant 2 : i32
    %c0_i32_35 = arith.constant 0 : i32
    %119 = tpu.memref_slice %arg9[%0, %c0_i32_35] : memref<16x32xf32, #tpu.memory_space<any>> -> memref<8x32xf32, #tpu.memory_space<any>>
    %120 = tpu.memref_slice %arg15[%c2_i32_34] : memref<4x!tpu.dma_semaphore, #tpu.memory_space<semaphore_mem>> -> memref<1x!tpu.dma_semaphore, #tpu.memory_space<semaphore_mem>>
    %121 = tpu.memref_squeeze %120 : memref<1x!tpu.dma_semaphore, #tpu.memory_space<semaphore_mem>> -> memref<!tpu.dma_semaphore, #tpu.memory_space<semaphore_mem>>
    tpu.wait_dma2 semaphore(%121 : memref<!tpu.dma_semaphore, #tpu.memory_space<semaphore_mem>>) src(%arg13 : memref<8x32xf32, #tpu.memory_space<vmem>>) dst(%119 : memref<8x32xf32, #tpu.memory_space<any>>)
    %c3_i32_36 = arith.constant 3 : i32
    %c0_i32_37 = arith.constant 0 : i32
    %122 = tpu.memref_slice %arg10[%0, %c0_i32_37] : memref<16x32xf32, #tpu.memory_space<any>> -> memref<8x32xf32, #tpu.memory_space<any>>
    %123 = tpu.memref_slice %arg15[%c3_i32_36] : memref<4x!tpu.dma_semaphore, #tpu.memory_space<semaphore_mem>> -> memref<1x!tpu.dma_semaphore, #tpu.memory_space<semaphore_mem>>
    %124 = tpu.memref_squeeze %123 : memref<1x!tpu.dma_semaphore, #tpu.memory_space<semaphore_mem>> -> memref<!tpu.dma_semaphore, #tpu.memory_space<semaphore_mem>>
    tpu.wait_dma2 semaphore(%124 : memref<!tpu.dma_semaphore, #tpu.memory_space<semaphore_mem>>) src(%arg14 : memref<8x32xf32, #tpu.memory_space<vmem>>) dst(%122 : memref<8x32xf32, #tpu.memory_space<any>>)
    return
  }
}

</mosaic_0001>

<llo_original>
// kernel: _lambda_.1
$region0: #{_lambda_.1}
  #allocation0 [shape = 'u32[]', space=smem, size = 0x4, offset = 0x4, fixed_abs, tag = 'smem constant byte address 0x4 - core index']
  #allocation1 [shape = 'u32[72,128]{1,0:T(1,128)}', space=vmem, size = 0x9000, scoped, tag = 'internal scratch']
  #allocation2 [shape = 'f32[16,32]{1,0:T(8,128)}', space=vmem, size = 0x2000, scoped, tag = 'scratch operand']
  #allocation3 [shape = 'f32[16,32]{1,0:T(8,128)}', space=vmem, size = 0x2000, scoped, tag = 'scratch operand']
  #allocation4 [shape = 'f32[8,32]{1,0:T(8,128)}', space=vmem, size = 0x1000, scoped, tag = 'scratch operand']
  #allocation5 [shape = 'f32[8,32]{1,0:T(8,128)}', space=vmem, size = 0x1000, scoped, tag = 'scratch operand']
  #allocation6 [shape = 's32[4]{0}', space=sflag, size = 0x10, scoped, tag = 'scratch operand']
  #allocation7 [shape = 's32[1]{0:T(128)S(6)}', space=smem, size = 0x200, scoped, tag = 'scoped memory for _lambda_.1']
  #allocation10 [shape = 's32[]', space=sflag, size = 0x4, offset = 0, fixed_abs, tag = 'sflag constant byte address 0x0 - dummy sync flag']
  #allocation11 [shape = 's32[]', space=sflag, size = 0x4, offset = 0, fixed_abs, tag = 'sflag constant byte address 0x0 - dummy sync flag']
  #allocation12 [shape = 's32[]', space=sflag, size = 0x4, offset = 0, fixed_abs, tag = 'sflag constant byte address 0x0 - dummy sync flag']
  #allocation13 [shape = 's32[]', space=sflag, size = 0x4, offset = 0, fixed_abs, tag = 'sflag constant byte address 0x0 - dummy sync flag']
  %s0 = inlined_call_operand.<no memory space> [shape: s32[1], index: 0, kind: input, shape index: {}]
  %s1 = inlined_call_operand.vmem [shape: f32[8,32], index: 1, kind: input, shape index: {}]
  %s2 = inlined_call_operand.vmem [shape: f32[32,96], index: 2, kind: input, shape index: {}]
  %s3 = inlined_call_operand.vmem [shape: f32[1,96], index: 3, kind: input, shape index: {}]
  %s4 = inlined_call_operand.vmem [shape: f32[32,32], index: 4, kind: input, shape index: {}]
  %s5 = inlined_call_operand.vmem [shape: f32[1,32], index: 5, kind: input, shape index: {}]
  %s6 = inlined_call_operand.vmem [shape: f32[16,32], index: 6, kind: input, shape index: {}, may-alias: {6,9}]
  %s7 = inlined_call_operand.vmem [shape: f32[16,32], index: 7, kind: input, shape index: {}, may-alias: {7,10}]
  %s8 = inlined_call_operand.hbm [shape: f32[8,32], index: 8, kind: output, shape index: {0}]
  %s9 = inlined_call_operand.vmem [shape: f32[16,32], index: 9, kind: output, shape index: {1}, may-alias: {6,9}]
  %s10 = inlined_call_operand.vmem [shape: f32[16,32], index: 10, kind: output, shape index: {2}, may-alias: {7,10}]
  %11 = xla_tuple %s8, %s9, %s10
  %s12 = sld [smem:[#allocation0]]
  $region140: #{_lambda_.1} parent=0
    _
  %s14 = ssub.s32 1, %s12
  %s15 = scalar_select 0, %s14, %s12
  %16 = sst [smem:[#allocation7]] %s0
  $region1: #{_lambda_.1} parent=0
    #allocation8 [shape = 'u8[4096]{0}', space=vmem, size = 0x1000, scoped, tag = 'output window, operand 0, single buffered']
    #allocation9 [shape = 's32[1]{0}', space=sflag, size = 0x4, scoped, tag = 'scoped memory for _lambda_.1']
    %17 = vsyncpa [#allocation9], 0
    // Predicated region
    $region2: #{_lambda_.1} parent=1 // pred_check
      _
    $region3: #{_lambda_.1} parent=1 // pred_check_branch
      %19 = sbr.rel (0) target = $region5
    $region4: #{_lambda_.1} parent=1 // pred_region
      _
    $region5: #{_lambda_.1} parent=1 // pred_fallthru
      _
    // Predicated region
    $region6: #{_lambda_.1} parent=1 // pred_check
      _
    $region7: #{_lambda_.1} parent=1 // pred_check_branch
      %21 = sbr.rel (0) target = $region9
    $region8: #{_lambda_.1} parent=1 // pred_region
      _
    $region9: #{_lambda_.1} parent=1 // pred_fallthru
      _
    // Predicated region
    $region10: #{_lambda_.1} parent=1 // pred_check
      _
    $region11: #{_lambda_.1} parent=1 // pred_check_branch
      %23 = sbr.rel (0) target = $region13
    $region12: #{_lambda_.1} parent=1 // pred_region
      _
    $region13: #{_lambda_.1} parent=1 // pred_fallthru
      _
    // Predicated region
    $region14: #{_lambda_.1} parent=1 // pred_check
      _
    $region15: #{_lambda_.1} parent=1 // pred_check_branch
      %25 = sbr.rel (0) target = $region17
    $region16: #{_lambda_.1} parent=1 // pred_region
      _
    $region17: #{_lambda_.1} parent=1 // pred_fallthru
      _
    // Predicated region
    $region18: #{_lambda_.1} parent=1 // pred_check
      _
    $region19: #{_lambda_.1} parent=1 // pred_check_branch
      %27 = sbr.rel (0) target = $region21
    $region20: #{_lambda_.1} parent=1 // pred_region
      _
    $region21: #{_lambda_.1} parent=1 // pred_fallthru
      _
    // Predicated region
    $region22: #{_lambda_.1} parent=1 // pred_check
      _
    $region23: #{_lambda_.1} parent=1 // pred_check_branch
      %29 = sbr.rel (0) target = $region25
    $region24: #{_lambda_.1} parent=1 // pred_region
      _
    $region25: #{_lambda_.1} parent=1 // pred_fallthru
      _
    %s30 = sld [smem:[#allocation7]]
    // Predicated region
    $region26: #{_lambda_.1} parent=1 // pred_check
      _
    $region27: #{_lambda_.1} parent=1 // pred_check_branch
      %32 = sbr.rel (0) target = $region29
    $region28: #{_lambda_.1} parent=1 // pred_region
      loop: start=0, step=1, limit=1
      $region30: #{_lambda_.1} parent=28 // loop_pre_header
        _
      $region31: #{_lambda_.1} parent=28 // loop_header
        %s34 = sphi 0, %s38
        %p35 = scmp.ge.s32.totalorder %s34, 1
        %s39 = sphi %s6, %s6
        %s40 = sphi [#allocation2], [#allocation2]
      $region32: #{_lambda_.1} parent=28 // loop_header_branch
        %37 = sbr.rel (%p35) target = $region36
      $region33: #{_lambda_.1} parent=28 // loop_body
        %v41 = vld [vmem:[%s39] sm:$0xff]
        %42 = vst [vmem:[%s40] sm:$0xff] %v41
        %v43 = vld [vmem:[%s39 + $0x8] sm:$0xff]
        %44 = vst [vmem:[%s40 + $0x8] sm:$0xff] %v43
      $region34: #{_lambda_.1} parent=28 // loop_footer
        %s38 = sadd.s32 1, %s34
      $region35: #{_lambda_.1} parent=28 // loop_footer_branch
        %33 = sbr.rel target = $region31
      $region36: #{_lambda_.1} parent=28 // loop_exit
        _
    $region29: #{_lambda_.1} parent=1 // pred_fallthru
      _
    // Predicated region
    $region37: #{_lambda_.1} parent=1 // pred_check
      _
    $region38: #{_lambda_.1} parent=1 // pred_check_branch
      %46 = sbr.rel target = $region40
    $region39: #{_lambda_.1} parent=1 // pred_region
      _
    $region40: #{_lambda_.1} parent=1 // pred_fallthru
      _
    // Predicated region
    $region41: #{_lambda_.1} parent=1 // pred_check
      _
    $region42: #{_lambda_.1} parent=1 // pred_check_branch
      %49 = sbr.rel (0) target = $region44
    $region43: #{_lambda_.1} parent=1 // pred_region
      %50 = vsyncadd [#allocation6], 256
    $region44: #{_lambda_.1} parent=1 // pred_fallthru
      _
    %s51 = scalar_lea.sflag [#allocation6], 1
    // Predicated region
    $region45: #{_lambda_.1} parent=1 // pred_check
      _
    $region46: #{_lambda_.1} parent=1 // pred_check_branch
      %53 = sbr.rel (0) target = $region48
    $region47: #{_lambda_.1} parent=1 // pred_region
      loop: start=0, step=1, limit=1
      $region49: #{_lambda_.1} parent=47 // loop_pre_header
        _
      $region50: #{_lambda_.1} parent=47 // loop_header
        %s55 = sphi 0, %s59
        %p56 = scmp.ge.s32.totalorder %s55, 1
        %s60 = sphi %s7, %s7
        %s61 = sphi [#allocation3], [#allocation3]
      $region51: #{_lambda_.1} parent=47 // loop_header_branch
        %58 = sbr.rel (%p56) target = $region55
      $region52: #{_lambda_.1} parent=47 // loop_body
        %v62 = vld [vmem:[%s60] sm:$0xff]
        %63 = vst [vmem:[%s61] sm:$0xff] %v62
        %v64 = vld [vmem:[%s60 + $0x8] sm:$0xff]
        %65 = vst [vmem:[%s61 + $0x8] sm:$0xff] %v64
      $region53: #{_lambda_.1} parent=47 // loop_footer
        %s59 = sadd.s32 1, %s55
      $region54: #{_lambda_.1} parent=47 // loop_footer_branch
        %54 = sbr.rel target = $region50
      $region55: #{_lambda_.1} parent=47 // loop_exit
        _
    $region48: #{_lambda_.1} parent=1 // pred_fallthru
      _
    // Predicated region
    $region56: #{_lambda_.1} parent=1 // pred_check
      _
    $region57: #{_lambda_.1} parent=1 // pred_check_branch
      %67 = sbr.rel target = $region59
    $region58: #{_lambda_.1} parent=1 // pred_region
      _
    $region59: #{_lambda_.1} parent=1 // pred_fallthru
      _
    // Predicated region
    $region60: #{_lambda_.1} parent=1 // pred_check
      _
    $region61: #{_lambda_.1} parent=1 // pred_check_branch
      %70 = sbr.rel (0) target = $region63
    $region62: #{_lambda_.1} parent=1 // pred_region
      %71 = vsyncadd %s51, 256
    $region63: #{_lambda_.1} parent=1 // pred_fallthru
      _
    %v72 = vld [vmem:[%s1] sm:$0xff]
    %v73 = vld [vmem:[%s2] sm:$0xff]
    %v74 = vld [vmem:[%s2 + $0x8] sm:$0xff]
    %v75 = vld [vmem:[%s2 + $0x10] sm:$0xff]
    %v76 = vld [vmem:[%s2 + $0x18] sm:$0xff]
    %v77 = vld [vmem:[%s3] sm:$0x1]
    %v79 = vperm.slane %v77, 0
    %vm81 = vcmask 261120
    %v83 = vsel %vm81, %v72, 0
    %85 = vmatpush.msra.mxu0 0.0
    %86 = vmatpush.msra.mxu0 0.0
    %87 = vmatpush.msra.mxu0 0.0
    %88 = vmatpush.msra.mxu0 0.0
    %89 = vmatpush.msra.mxu0 0.0
    %90 = vmatpush.msra.mxu0 0.0
    %91 = vmatpush.msra.mxu0 0.0
    %92 = vmatpush.msra.mxu0 0.0
    %93 = vmatpush.msra.mxu0 0.0
    %94 = vmatpush.msra.mxu0 0.0
    %95 = vmatpush.msra.mxu0 0.0
    %96 = vmatpush.msra.mxu0 0.0
    %97 = vmatpush.msra.mxu0 %v76
    %98 = vmatpush.msra.mxu0 %v75
    %99 = vmatpush.msra.mxu0 %v74
    %100 = vmatpush.msra.mxu0 %v73
    %101 = vmatmul.f32.gmra.mxu0 %v83
    %v102 = vpop.f32.mrf.mxu0
    %v103 = vadd.f32 %v79, %v102
    %104 = vdwg.mxu0
    %s105 = smul.u32 16, 1
    %s106 = sshll.u32 %s105, 4
    %107 = dma.done [#allocation6], %s106
    %s108 = sshll.u32 %s105, 4
    %109 = dma.done %s51, %s108
    %111 = vrot.lane.b32.xlu0 %v103, 96
    %v112 = vpop.permute.xlu0 %111
    %114 = vst.msk [vmem:[#allocation4] sm:$0xff] %vm81, %v112
    %115 = vrot.lane.b32.xlu0 %v103, 64
    %v116 = vpop.permute.xlu0 %115
    %118 = vst.msk [vmem:[#allocation5] sm:$0xff] %vm81, %v116
    %s119 = scalar_lea.vmem %s9, %s30
    %s120 = scalar_lea.sflag [#allocation6], 2
    // Predicated region
    $region64: #{_lambda_.1} parent=1 // pred_check
      _
    $region65: #{_lambda_.1} parent=1 // pred_check_branch
      %122 = sbr.rel (0) target = $region67
    $region66: #{_lambda_.1} parent=1 // pred_region
      // Predicated region
      $region79: #{_lambda_.1} parent=66 // pred_check
        _
      $region80: #{_lambda_.1} parent=66 // pred_check_branch
        %138 = sbr.rel (0) target = $region82
      $region81: #{_lambda_.1} parent=66 // pred_region
        loop: start=0, step=1, limit=1
        $region83: #{_lambda_.1} parent=81 // loop_pre_header
          _
        $region84: #{_lambda_.1} parent=81 // loop_header
          %s140 = sphi 0, %s144
          %p141 = scmp.ge.s32.totalorder %s140, 1
          %s145 = sphi [#allocation4], [#allocation4]
          %s146 = sphi %s119, %s119
        $region85: #{_lambda_.1} parent=81 // loop_header_branch
          %143 = sbr.rel (%p141) target = $region89
        $region86: #{_lambda_.1} parent=81 // loop_body
          %v147 = vld [vmem:[%s145] sm:$0xff]
          %148 = vst [vmem:[%s146] sm:$0xff] %v147
        $region87: #{_lambda_.1} parent=81 // loop_footer
          %s144 = sadd.s32 1, %s140
        $region88: #{_lambda_.1} parent=81 // loop_footer_branch
          %139 = sbr.rel target = $region84
        $region89: #{_lambda_.1} parent=81 // loop_exit
          _
      $region82: #{_lambda_.1} parent=66 // pred_fallthru
        _
      // Predicated region
      $region90: #{_lambda_.1} parent=66 // pred_check
        _
      $region91: #{_lambda_.1} parent=66 // pred_check_branch
        %150 = sbr.rel target = $region93
      $region92: #{_lambda_.1} parent=66 // pred_region
        _
      $region93: #{_lambda_.1} parent=66 // pred_fallthru
        _
    $region67: #{_lambda_.1} parent=1 // pred_fallthru
      _
    // Predicated region
    $region68: #{_lambda_.1} parent=1 // pred_check
      _
    $region69: #{_lambda_.1} parent=1 // pred_check_branch
      %124 = sbr.rel target = $region71
    $region70: #{_lambda_.1} parent=1 // pred_region
      %s126 = ssub.s32 256, 1
      loop: start=0, step=1, limit=1
      $region72: #{_lambda_.1} parent=70 // loop_pre_header
        _
      $region73: #{_lambda_.1} parent=70 // loop_header
        %s128 = sphi 0, %s132
        %p129 = scmp.ge.s32.totalorder %s128, 1
        %s133 = sphi [#allocation4], [#allocation4]
        %s134 = sphi %s119, %s119
      $region74: #{_lambda_.1} parent=70 // loop_header_branch
        %131 = sbr.rel (%p129) target = $region78
      $region75: #{_lambda_.1} parent=70 // loop_body
        %v135 = vld [vmem:[%s133] sm:%s126]
        %136 = vst [vmem:[%s134] sm:%s126] %v135
      $region76: #{_lambda_.1} parent=70 // loop_footer
        %s132 = sadd.s32 1, %s128
      $region77: #{_lambda_.1} parent=70 // loop_footer_branch
        %127 = sbr.rel target = $region73
      $region78: #{_lambda_.1} parent=70 // loop_exit
        _
    $region71: #{_lambda_.1} parent=1 // pred_fallthru
      _
    // Predicated region
    $region94: #{_lambda_.1} parent=1 // pred_check
      _
    $region95: #{_lambda_.1} parent=1 // pred_check_branch
      %153 = sbr.rel (0) target = $region97
    $region96: #{_lambda_.1} parent=1 // pred_region
      %154 = vsyncadd %s120, 128
    $region97: #{_lambda_.1} parent=1 // pred_fallthru
      _
    %s155 = scalar_lea.vmem %s10, %s30
    %s156 = scalar_lea.sflag [#allocation6], 3
    // Predicated region
    $region98: #{_lambda_.1} parent=1 // pred_check
      _
    $region99: #{_lambda_.1} parent=1 // pred_check_branch
      %158 = sbr.rel (0) target = $region101
    $region100: #{_lambda_.1} parent=1 // pred_region
      // Predicated region
      $region113: #{_lambda_.1} parent=100 // pred_check
        _
      $region114: #{_lambda_.1} parent=100 // pred_check_branch
        %174 = sbr.rel (0) target = $region116
      $region115: #{_lambda_.1} parent=100 // pred_region
        loop: start=0, step=1, limit=1
        $region117: #{_lambda_.1} parent=115 // loop_pre_header
          _
        $region118: #{_lambda_.1} parent=115 // loop_header
          %s176 = sphi 0, %s180
          %p177 = scmp.ge.s32.totalorder %s176, 1
          %s181 = sphi [#allocation5], [#allocation5]
          %s182 = sphi %s155, %s155
        $region119: #{_lambda_.1} parent=115 // loop_header_branch
          %179 = sbr.rel (%p177) target = $region123
        $region120: #{_lambda_.1} parent=115 // loop_body
          %v183 = vld [vmem:[%s181] sm:$0xff]
          %184 = vst [vmem:[%s182] sm:$0xff] %v183
        $region121: #{_lambda_.1} parent=115 // loop_footer
          %s180 = sadd.s32 1, %s176
        $region122: #{_lambda_.1} parent=115 // loop_footer_branch
          %175 = sbr.rel target = $region118
        $region123: #{_lambda_.1} parent=115 // loop_exit
          _
      $region116: #{_lambda_.1} parent=100 // pred_fallthru
        _
      // Predicated region
      $region124: #{_lambda_.1} parent=100 // pred_check
        _
      $region125: #{_lambda_.1} parent=100 // pred_check_branch
        %186 = sbr.rel target = $region127
      $region126: #{_lambda_.1} parent=100 // pred_region
        _
      $region127: #{_lambda_.1} parent=100 // pred_fallthru
        _
    $region101: #{_lambda_.1} parent=1 // pred_fallthru
      _
    // Predicated region
    $region102: #{_lambda_.1} parent=1 // pred_check
      _
    $region103: #{_lambda_.1} parent=1 // pred_check_branch
      %160 = sbr.rel target = $region105
    $region104: #{_lambda_.1} parent=1 // pred_region
      %s162 = ssub.s32 256, 1
      loop: start=0, step=1, limit=1
      $region106: #{_lambda_.1} parent=104 // loop_pre_header
        _
      $region107: #{_lambda_.1} parent=104 // loop_header
        %s164 = sphi 0, %s168
        %p165 = scmp.ge.s32.totalorder %s164, 1
        %s169 = sphi [#allocation5], [#allocation5]
        %s170 = sphi %s155, %s155
      $region108: #{_lambda_.1} parent=104 // loop_header_branch
        %167 = sbr.rel (%p165) target = $region112
      $region109: #{_lambda_.1} parent=104 // loop_body
        %v171 = vld [vmem:[%s169] sm:%s162]
        %172 = vst [vmem:[%s170] sm:%s162] %v171
      $region110: #{_lambda_.1} parent=104 // loop_footer
        %s168 = sadd.s32 1, %s164
      $region111: #{_lambda_.1} parent=104 // loop_footer_branch
        %163 = sbr.rel target = $region107
      $region112: #{_lambda_.1} parent=104 // loop_exit
        _
    $region105: #{_lambda_.1} parent=1 // pred_fallthru
      _
    // Predicated region
    $region128: #{_lambda_.1} parent=1 // pred_check
      _
    $region129: #{_lambda_.1} parent=1 // pred_check_branch
      %189 = sbr.rel (0) target = $region131
    $region130: #{_lambda_.1} parent=1 // pred_region
      %190 = vsyncadd %s156, 128
    $region131: #{_lambda_.1} parent=1 // pred_fallthru
      _
    %v191 = vld [vmem:[#allocation2] sm:$0xff]
    %v192 = vld [vmem:[#allocation2 + $0x8] sm:$0xff]
    %v193 = vld [vmem:[#allocation3] sm:$0xff]
    %v194 = vld [vmem:[#allocation3 + $0x8] sm:$0xff]
    %195 = vrot.lane.b32.xlu0 %v103, 120
    %v196 = vpop.permute.xlu0 %195
    %197 = vrot.lane.b32.xlu0 %v103, 112
    %v198 = vpop.permute.xlu0 %197
    %199 = vrot.lane.b32.xlu0 %v103, 104
    %v200 = vpop.permute.xlu0 %199
    %203 = vrot.lane.b32.xlu0 %v191, 120
    %v204 = vpop.permute.xlu0 %203
    %205 = vrot.lane.b32.xlu0 %v192, 120
    %v206 = vpop.permute.xlu0 %205
    %207 = vrot.lane.b32.xlu0 %v191, 112
    %v208 = vpop.permute.xlu0 %207
    %209 = vrot.lane.b32.xlu0 %v192, 112
    %v210 = vpop.permute.xlu0 %209
    %211 = vrot.lane.b32.xlu0 %v191, 104
    %v212 = vpop.permute.xlu0 %211
    %213 = vrot.lane.b32.xlu0 %v192, 104
    %v214 = vpop.permute.xlu0 %213
    %217 = vrot.lane.b32.xlu0 %v193, 120
    %v218 = vpop.permute.xlu0 %217
    %219 = vrot.lane.b32.xlu0 %v194, 120
    %v220 = vpop.permute.xlu0 %219
    %223 = vrot.lane.b32.xlu0 %v193, 112
    %v224 = vpop.permute.xlu0 %223
    %225 = vrot.lane.b32.xlu0 %v194, 112
    %v226 = vpop.permute.xlu0 %225
    %229 = vrot.lane.b32.xlu0 %v193, 104
    %v230 = vpop.permute.xlu0 %229
    %231 = vrot.lane.b32.xlu0 %v194, 104
    %v232 = vpop.permute.xlu0 %231
    %vm235 = vcmask 64512
    %v236 = vsel %vm235, %v103, 0
    %v238 = vsel %vm235, %v191, 0
    %v240 = vsel %vm235, %v192, 0
    %242 = vmatpush.xpose.msra.mxu0 0.0
    %243 = vmatpush.xpose.msra.mxu0 0.0
    %244 = vmatpush.xpose.msra.mxu0 0.0
    %245 = vmatpush.xpose.msra.mxu0 0.0
    %246 = vmatpush.xpose.msra.mxu0 0.0
    %247 = vmatpush.xpose.msra.mxu0 0.0
    %248 = vmatpush.xpose.msra.mxu0 0.0
    %249 = vmatpush.xpose.msra.mxu0 0.0
    %250 = vmatpush.xpose.msra.mxu0 0.0
    %251 = vmatpush.xpose.msra.mxu0 0.0
    %252 = vmatpush.xpose.msra.mxu0 0.0
    %253 = vmatpush.xpose.msra.mxu0 0.0
    %254 = vmatpush.xpose.msra.mxu0 0.0
    %255 = vmatpush.xpose.msra.mxu0 0.0
    %256 = vmatpush.xpose.msra.mxu0 %v240
    %257 = vmatpush.xpose.msra.mxu0 %v238
    %258 = vmatmul.f32.gmra.mxu0 %v236
    %v259 = vpop.f32.mrf.mxu0
    %v260 = vadd.f32 0.0, %v259
    %261 = vdwg.mxu0
    %v262 = vsel %vm235, %v196, 0
    %v264 = vsel %vm235, %v204, 0
    %v266 = vsel %vm235, %v206, 0
    %268 = vmatpush.xpose.msra.mxu0 0.0
    %269 = vmatpush.xpose.msra.mxu0 0.0
    %270 = vmatpush.xpose.msra.mxu0 0.0
    %271 = vmatpush.xpose.msra.mxu0 0.0
    %272 = vmatpush.xpose.msra.mxu0 0.0
    %273 = vmatpush.xpose.msra.mxu0 0.0
    %274 = vmatpush.xpose.msra.mxu0 0.0
    %275 = vmatpush.xpose.msra.mxu0 0.0
    %276 = vmatpush.xpose.msra.mxu0 0.0
    %277 = vmatpush.xpose.msra.mxu0 0.0
    %278 = vmatpush.xpose.msra.mxu0 0.0
    %279 = vmatpush.xpose.msra.mxu0 0.0
    %280 = vmatpush.xpose.msra.mxu0 0.0
    %281 = vmatpush.xpose.msra.mxu0 0.0
    %282 = vmatpush.xpose.msra.mxu0 %v266
    %283 = vmatpush.xpose.msra.mxu0 %v264
    %284 = vmatmul.f32.gmra.mxu0 %v262
    %v285 = vpop.f32.mrf.mxu0
    %v286 = vadd.f32 0.0, %v285
    %287 = vdwg.mxu0
    %v288 = vsel %vm235, %v198, 0
    %v290 = vsel %vm235, %v208, 0
    %v292 = vsel %vm235, %v210, 0
    %294 = vmatpush.xpose.msra.mxu0 0.0
    %295 = vmatpush.xpose.msra.mxu0 0.0
    %296 = vmatpush.xpose.msra.mxu0 0.0
    %297 = vmatpush.xpose.msra.mxu0 0.0
    %298 = vmatpush.xpose.msra.mxu0 0.0
    %299 = vmatpush.xpose.msra.mxu0 0.0
    %300 = vmatpush.xpose.msra.mxu0 0.0
    %301 = vmatpush.xpose.msra.mxu0 0.0
    %302 = vmatpush.xpose.msra.mxu0 0.0
    %303 = vmatpush.xpose.msra.mxu0 0.0
    %304 = vmatpush.xpose.msra.mxu0 0.0
    %305 = vmatpush.xpose.msra.mxu0 0.0
    %306 = vmatpush.xpose.msra.mxu0 0.0
    %307 = vmatpush.xpose.msra.mxu0 0.0
    %308 = vmatpush.xpose.msra.mxu0 %v292
    %309 = vmatpush.xpose.msra.mxu0 %v290
    %310 = vmatmul.f32.gmra.mxu0 %v288
    %v311 = vpop.f32.mrf.mxu0
    %v312 = vadd.f32 0.0, %v311
    %313 = vdwg.mxu0
    %v314 = vsel %vm235, %v200, 0
    %v316 = vsel %vm235, %v212, 0
    %v318 = vsel %vm235, %v214, 0
    %320 = vmatpush.xpose.msra.mxu0 0.0
    %321 = vmatpush.xpose.msra.mxu0 0.0
    %322 = vmatpush.xpose.msra.mxu0 0.0
    %323 = vmatpush.xpose.msra.mxu0 0.0
    %324 = vmatpush.xpose.msra.mxu0 0.0
    %325 = vmatpush.xpose.msra.mxu0 0.0
    %326 = vmatpush.xpose.msra.mxu0 0.0
    %327 = vmatpush.xpose.msra.mxu0 0.0
    %328 = vmatpush.xpose.msra.mxu0 0.0
    %329 = vmatpush.xpose.msra.mxu0 0.0
    %330 = vmatpush.xpose.msra.mxu0 0.0
    %331 = vmatpush.xpose.msra.mxu0 0.0
    %332 = vmatpush.xpose.msra.mxu0 0.0
    %333 = vmatpush.xpose.msra.mxu0 0.0
    %334 = vmatpush.xpose.msra.mxu0 %v318
    %335 = vmatpush.xpose.msra.mxu0 %v316
    %336 = vmatmul.f32.gmra.mxu0 %v314
    %v337 = vpop.f32.mrf.mxu0
    %v338 = vadd.f32 0.0, %v337
    %339 = vdwg.mxu0
    %v340 = vsel %vm235, %v112, 0
    %342 = vmatpush.xpose.msra.mxu0 0.0
    %343 = vmatpush.xpose.msra.mxu0 0.0
    %344 = vmatpush.xpose.msra.mxu0 0.0
    %345 = vmatpush.xpose.msra.mxu0 0.0
    %346 = vmatpush.xpose.msra.mxu0 0.0
    %347 = vmatpush.xpose.msra.mxu0 0.0
    %348 = vmatpush.xpose.msra.mxu0 0.0
    %349 = vmatpush.xpose.msra.mxu0 0.0
    %350 = vmatpush.xpose.msra.mxu0 0.0
    %351 = vmatpush.xpose.msra.mxu0 0.0
    %352 = vmatpush.xpose.msra.mxu0 0.0
    %353 = vmatpush.xpose.msra.mxu0 0.0
    %354 = vmatpush.xpose.msra.mxu0 0.0
    %355 = vmatpush.xpose.msra.mxu0 0.0
    %356 = vmatpush.xpose.msra.mxu0 0.0
    %357 = vmatpush.xpose.msra.mxu0 %v340
    %358 = vmatmul.f32.gmra.mxu0 %v236
    %v359 = vpop.f32.mrf.mxu0
    %v360 = vadd.f32 0.0, %v359
    %361 = vdwg.mxu0
    %362 = vrot.lane.b32.xlu0 %v196, 96
    %v363 = vpop.permute.xlu0 %362
    %v364 = vsel %vm235, %v363, 0
    %366 = vmatpush.xpose.msra.mxu0 0.0
    %367 = vmatpush.xpose.msra.mxu0 0.0
    %368 = vmatpush.xpose.msra.mxu0 0.0
    %369 = vmatpush.xpose.msra.mxu0 0.0
    %370 = vmatpush.xpose.msra.mxu0 0.0
    %371 = vmatpush.xpose.msra.mxu0 0.0
    %372 = vmatpush.xpose.msra.mxu0 0.0
    %373 = vmatpush.xpose.msra.mxu0 0.0
    %374 = vmatpush.xpose.msra.mxu0 0.0
    %375 = vmatpush.xpose.msra.mxu0 0.0
    %376 = vmatpush.xpose.msra.mxu0 0.0
    %377 = vmatpush.xpose.msra.mxu0 0.0
    %378 = vmatpush.xpose.msra.mxu0 0.0
    %379 = vmatpush.xpose.msra.mxu0 0.0
    %380 = vmatpush.xpose.msra.mxu0 0.0
    %381 = vmatpush.xpose.msra.mxu0 %v364
    %382 = vmatmul.f32.gmra.mxu0 %v262
    %v383 = vpop.f32.mrf.mxu0
    %v384 = vadd.f32 0.0, %v383
    %385 = vdwg.mxu0
    %386 = vrot.lane.b32.xlu0 %v198, 96
    %v387 = vpop.permute.xlu0 %386
    %v388 = vsel %vm235, %v387, 0
    %390 = vmatpush.xpose.msra.mxu0 0.0
    %391 = vmatpush.xpose.msra.mxu0 0.0
    %392 = vmatpush.xpose.msra.mxu0 0.0
    %393 = vmatpush.xpose.msra.mxu0 0.0
    %394 = vmatpush.xpose.msra.mxu0 0.0
    %395 = vmatpush.xpose.msra.mxu0 0.0
    %396 = vmatpush.xpose.msra.mxu0 0.0
    %397 = vmatpush.xpose.msra.mxu0 0.0
    %398 = vmatpush.xpose.msra.mxu0 0.0
    %399 = vmatpush.xpose.msra.mxu0 0.0
    %400 = vmatpush.xpose.msra.mxu0 0.0
    %401 = vmatpush.xpose.msra.mxu0 0.0
    %402 = vmatpush.xpose.msra.mxu0 0.0
    %403 = vmatpush.xpose.msra.mxu0 0.0
    %404 = vmatpush.xpose.msra.mxu0 0.0
    %405 = vmatpush.xpose.msra.mxu0 %v388
    %406 = vmatmul.f32.gmra.mxu0 %v288
    %v407 = vpop.f32.mrf.mxu0
    %v408 = vadd.f32 0.0, %v407
    %409 = vdwg.mxu0
    %410 = vrot.lane.b32.xlu0 %v200, 96
    %v411 = vpop.permute.xlu0 %410
    %v412 = vsel %vm235, %v411, 0
    %414 = vmatpush.xpose.msra.mxu0 0.0
    %415 = vmatpush.xpose.msra.mxu0 0.0
    %416 = vmatpush.xpose.msra.mxu0 0.0
    %417 = vmatpush.xpose.msra.mxu0 0.0
    %418 = vmatpush.xpose.msra.mxu0 0.0
    %419 = vmatpush.xpose.msra.mxu0 0.0
    %420 = vmatpush.xpose.msra.mxu0 0.0
    %421 = vmatpush.xpose.msra.mxu0 0.0
    %422 = vmatpush.xpose.msra.mxu0 0.0
    %423 = vmatpush.xpose.msra.mxu0 0.0
    %424 = vmatpush.xpose.msra.mxu0 0.0
    %425 = vmatpush.xpose.msra.mxu0 0.0
    %426 = vmatpush.xpose.msra.mxu0 0.0
    %427 = vmatpush.xpose.msra.mxu0 0.0
    %428 = vmatpush.xpose.msra.mxu0 0.0
    %429 = vmatpush.xpose.msra.mxu0 %v412
    %430 = vmatmul.f32.gmra.mxu0 %v314
    %v431 = vpop.f32.mrf.mxu0
    %v432 = vadd.f32 0.0, %v431
    %433 = vdwg.mxu0
    %v434 = vlaneseq
    %v435 = vand.u32 %v434, 127
    %v436 = vstv %s30
    %vm437 = vcmp.lt.s32.totalorder %v435, %v436
    %v438 = vsel %vm437, %v260, -1e+30
    %v439 = vsel %vm437, %v286, -1e+30
    %v440 = vsel %vm437, %v312, -1e+30
    %v441 = vsel %vm437, %v338, -1e+30
    %vm442 = vcmask 130048
    %v443 = vsel %vm442, %v438, -inf
    %444 = vmax.xlane.f32.xlu0 %v443
    %v445 = vpop.xlane.xlu0 %444
    %v446 = vsel %vm442, %v439, -inf
    %447 = vmax.xlane.f32.xlu0 %v446
    %v448 = vpop.xlane.xlu0 %447
    %v449 = vsel %vm442, %v440, -inf
    %450 = vmax.xlane.f32.xlu0 %v449
    %v451 = vpop.xlane.xlu0 %450
    %v452 = vsel %vm442, %v441, -inf
    %453 = vmax.xlane.f32.xlu0 %v452
    %v454 = vpop.xlane.xlu0 %453
    %v455 = vsel %vm235, %v360, -inf
    %456 = vmax.xlane.f32.xlu0 %v455
    %v457 = vpop.xlane.xlu0 %456
    %v458 = vsel %vm235, %v384, -inf
    %459 = vmax.xlane.f32.xlu0 %v458
    %v460 = vpop.xlane.xlu0 %459
    %v461 = vsel %vm235, %v408, -inf
    %462 = vmax.xlane.f32.xlu0 %v461
    %v463 = vpop.xlane.xlu0 %462
    %v464 = vsel %vm235, %v432, -inf
    %465 = vmax.xlane.f32.xlu0 %v464
    %v466 = vpop.xlane.xlu0 %465
    %v467 = vmax.f32 %v445, %v457
    %v468 = vmax.f32 %v448, %v460
    %v469 = vmax.f32 %v451, %v463
    %v470 = vmax.f32 %v454, %v466
    %v471 = vsub.f32 %v438, %v467
    %v472 = vsub.f32 %v439, %v468
    %v473 = vsub.f32 %v440, %v469
    %v474 = vsub.f32 %v441, %v470
    %v475 = vmul.f32 %v471, 1.442695
    %v476 = vpow.pop %v475
    %v477 = vmul.f32 %v472, 1.442695
    %v478 = vpow.pop %v477
    %v479 = vmul.f32 %v473, 1.442695
    %v480 = vpow.pop %v479
    %v481 = vmul.f32 %v474, 1.442695
    %v482 = vpow.pop %v481
    %v483 = vsub.f32 %v360, %v467
    %v484 = vsub.f32 %v384, %v468
    %v485 = vsub.f32 %v408, %v469
    %v486 = vsub.f32 %v432, %v470
    %v487 = vmul.f32 %v483, 1.442695
    %v488 = vpow.pop %v487
    %v489 = vmul.f32 %v484, 1.442695
    %v490 = vpow.pop %v489
    %v491 = vmul.f32 %v485, 1.442695
    %v492 = vpow.pop %v491
    %v493 = vmul.f32 %v486, 1.442695
    %v494 = vpow.pop %v493
    %v495 = vsel %vm442, %v476, 0.0
    %496 = vadd.xlane.f32.xlu0 %v495
    %v497 = vpop.xlane.xlu0 %496
    %v498 = vsel %vm442, %v478, 0.0
    %499 = vadd.xlane.f32.xlu0 %v498
    %v500 = vpop.xlane.xlu0 %499
    %v501 = vsel %vm442, %v480, 0.0
    %502 = vadd.xlane.f32.xlu0 %v501
    %v503 = vpop.xlane.xlu0 %502
    %v504 = vsel %vm442, %v482, 0.0
    %505 = vadd.xlane.f32.xlu0 %v504
    %v506 = vpop.xlane.xlu0 %505
    %v507 = vsel %vm235, %v488, 0.0
    %508 = vadd.xlane.f32.xlu0 %v507
    %v509 = vpop.xlane.xlu0 %508
    %v510 = vsel %vm235, %v490, 0.0
    %511 = vadd.xlane.f32.xlu0 %v510
    %v512 = vpop.xlane.xlu0 %511
    %v513 = vsel %vm235, %v492, 0.0
    %514 = vadd.xlane.f32.xlu0 %v513
    %v515 = vpop.xlane.xlu0 %514
    %v516 = vsel %vm235, %v494, 0.0
    %517 = vadd.xlane.f32.xlu0 %v516
    %v518 = vpop.xlane.xlu0 %517
    %v519 = vadd.f32 %v497, %v509
    %v520 = vadd.f32 %v500, %v512
    %v521 = vadd.f32 %v503, %v515
    %v522 = vadd.f32 %v506, %v518
    %v523 = vrcp.pop %v519
    %v524 = vrcp.pop %v520
    %v525 = vrcp.pop %v521
    %v526 = vrcp.pop %v522
    %v527 = vmul.f32 %v476, %v523
    %v528 = vmul.f32 %v478, %v524
    %v529 = vmul.f32 %v480, %v525
    %v530 = vmul.f32 %v482, %v526
    %v531 = vmul.f32 %v488, %v523
    %v532 = vmul.f32 %v490, %v524
    %v533 = vmul.f32 %v492, %v525
    %v534 = vmul.f32 %v494, %v526
    %v536 = vsel %vm235, %v531, 0
    %538 = vmatpush.msra.mxu0 0.0
    %539 = vmatpush.msra.mxu0 0.0
    %540 = vmatpush.msra.mxu0 0.0
    %541 = vmatpush.msra.mxu0 0.0
    %542 = vmatpush.msra.mxu0 0.0
    %543 = vmatpush.msra.mxu0 0.0
    %544 = vmatpush.msra.mxu0 0.0
    %545 = vmatpush.msra.mxu0 0.0
    %546 = vmatpush.msra.mxu0 0.0
    %547 = vmatpush.msra.mxu0 0.0
    %548 = vmatpush.msra.mxu0 0.0
    %549 = vmatpush.msra.mxu0 0.0
    %550 = vmatpush.msra.mxu0 0.0
    %551 = vmatpush.msra.mxu0 0.0
    %552 = vmatpush.msra.mxu0 0.0
    %553 = vmatpush.msra.mxu0 %v116
    %554 = vmatmul.f32.gmra.mxu0 %v536
    %v555 = vpop.f32.mrf.mxu0
    %v556 = vadd.f32 0.0, %v555
    %557 = vdwg.mxu0
    %558 = vrot.lane.b32.xlu0 %v196, 64
    %v559 = vpop.permute.xlu0 %558
    %v562 = vsel %vm235, %v532, 0
    %564 = vmatpush.msra.mxu0 0.0
    %565 = vmatpush.msra.mxu0 0.0
    %566 = vmatpush.msra.mxu0 0.0
    %567 = vmatpush.msra.mxu0 0.0
    %568 = vmatpush.msra.mxu0 0.0
    %569 = vmatpush.msra.mxu0 0.0
    %570 = vmatpush.msra.mxu0 0.0
    %571 = vmatpush.msra.mxu0 0.0
    %572 = vmatpush.msra.mxu0 0.0
    %573 = vmatpush.msra.mxu0 0.0
    %574 = vmatpush.msra.mxu0 0.0
    %575 = vmatpush.msra.mxu0 0.0
    %576 = vmatpush.msra.mxu0 0.0
    %577 = vmatpush.msra.mxu0 0.0
    %578 = vmatpush.msra.mxu0 0.0
    %579 = vmatpush.msra.mxu0 %v559
    %580 = vmatmul.f32.gmra.mxu0 %v562
    %v581 = vpop.f32.mrf.mxu0
    %v582 = vadd.f32 0.0, %v581
    %583 = vdwg.mxu0
    %584 = vrot.lane.b32.xlu0 %v198, 64
    %v585 = vpop.permute.xlu0 %584
    %v588 = vsel %vm235, %v533, 0
    %590 = vmatpush.msra.mxu0 0.0
    %591 = vmatpush.msra.mxu0 0.0
    %592 = vmatpush.msra.mxu0 0.0
    %593 = vmatpush.msra.mxu0 0.0
    %594 = vmatpush.msra.mxu0 0.0
    %595 = vmatpush.msra.mxu0 0.0
    %596 = vmatpush.msra.mxu0 0.0
    %597 = vmatpush.msra.mxu0 0.0
    %598 = vmatpush.msra.mxu0 0.0
    %599 = vmatpush.msra.mxu0 0.0
    %600 = vmatpush.msra.mxu0 0.0
    %601 = vmatpush.msra.mxu0 0.0
    %602 = vmatpush.msra.mxu0 0.0
    %603 = vmatpush.msra.mxu0 0.0
    %604 = vmatpush.msra.mxu0 0.0
    %605 = vmatpush.msra.mxu0 %v585
    %606 = vmatmul.f32.gmra.mxu0 %v588
    %v607 = vpop.f32.mrf.mxu0
    %v608 = vadd.f32 0.0, %v607
    %609 = vdwg.mxu0
    %610 = vrot.lane.b32.xlu0 %v200, 64
    %v611 = vpop.permute.xlu0 %610
    %v614 = vsel %vm235, %v534, 0
    %616 = vmatpush.msra.mxu0 0.0
    %617 = vmatpush.msra.mxu0 0.0
    %618 = vmatpush.msra.mxu0 0.0
    %619 = vmatpush.msra.mxu0 0.0
    %620 = vmatpush.msra.mxu0 0.0
    %621 = vmatpush.msra.mxu0 0.0
    %622 = vmatpush.msra.mxu0 0.0
    %623 = vmatpush.msra.mxu0 0.0
    %624 = vmatpush.msra.mxu0 0.0
    %625 = vmatpush.msra.mxu0 0.0
    %626 = vmatpush.msra.mxu0 0.0
    %627 = vmatpush.msra.mxu0 0.0
    %628 = vmatpush.msra.mxu0 0.0
    %629 = vmatpush.msra.mxu0 0.0
    %630 = vmatpush.msra.mxu0 0.0
    %631 = vmatpush.msra.mxu0 %v611
    %632 = vmatmul.f32.gmra.mxu0 %v614
    %v633 = vpop.f32.mrf.mxu0
    %v634 = vadd.f32 0.0, %v633
    %635 = vdwg.mxu0
    %v637 = vsel %vm442, %v527, 0
    %639 = vmatpush.msra.mxu0 0.0
    %640 = vmatpush.msra.mxu0 0.0
    %641 = vmatpush.msra.mxu0 0.0
    %642 = vmatpush.msra.mxu0 0.0
    %643 = vmatpush.msra.mxu0 0.0
    %644 = vmatpush.msra.mxu0 0.0
    %645 = vmatpush.msra.mxu0 0.0
    %646 = vmatpush.msra.mxu0 0.0
    %647 = vmatpush.msra.mxu0 0.0
    %648 = vmatpush.msra.mxu0 0.0
    %649 = vmatpush.msra.mxu0 0.0
    %650 = vmatpush.msra.mxu0 0.0
    %651 = vmatpush.msra.mxu0 0.0
    %652 = vmatpush.msra.mxu0 0.0
    %653 = vmatpush.msra.mxu0 %v194
    %654 = vmatpush.msra.mxu0 %v193
    %655 = vmatmul.f32.gmra.mxu0 %v637
    %v656 = vpop.f32.mrf.mxu0
    %v657 = vadd.f32 %v556, %v656
    %658 = vdwg.mxu0
    %v660 = vsel %vm442, %v528, 0
    %662 = vmatpush.msra.mxu0 0.0
    %663 = vmatpush.msra.mxu0 0.0
    %664 = vmatpush.msra.mxu0 0.0
    %665 = vmatpush.msra.mxu0 0.0
    %666 = vmatpush.msra.mxu0 0.0
    %667 = vmatpush.msra.mxu0 0.0
    %668 = vmatpush.msra.mxu0 0.0
    %669 = vmatpush.msra.mxu0 0.0
    %670 = vmatpush.msra.mxu0 0.0
    %671 = vmatpush.msra.mxu0 0.0
    %672 = vmatpush.msra.mxu0 0.0
    %673 = vmatpush.msra.mxu0 0.0
    %674 = vmatpush.msra.mxu0 0.0
    %675 = vmatpush.msra.mxu0 0.0
    %676 = vmatpush.msra.mxu0 %v220
    %677 = vmatpush.msra.mxu0 %v218
    %678 = vmatmul.f32.gmra.mxu0 %v660
    %v679 = vpop.f32.mrf.mxu0
    %v680 = vadd.f32 %v582, %v679
    %681 = vdwg.mxu0
    %v683 = vsel %vm442, %v529, 0
    %685 = vmatpush.msra.mxu0 0.0
    %686 = vmatpush.msra.mxu0 0.0
    %687 = vmatpush.msra.mxu0 0.0
    %688 = vmatpush.msra.mxu0 0.0
    %689 = vmatpush.msra.mxu0 0.0
    %690 = vmatpush.msra.mxu0 0.0
    %691 = vmatpush.msra.mxu0 0.0
    %692 = vmatpush.msra.mxu0 0.0
    %693 = vmatpush.msra.mxu0 0.0
    %694 = vmatpush.msra.mxu0 0.0
    %695 = vmatpush.msra.mxu0 0.0
    %696 = vmatpush.msra.mxu0 0.0
    %697 = vmatpush.msra.mxu0 0.0
    %698 = vmatpush.msra.mxu0 0.0
    %699 = vmatpush.msra.mxu0 %v226
    %700 = vmatpush.msra.mxu0 %v224
    %701 = vmatmul.f32.gmra.mxu0 %v683
    %v702 = vpop.f32.mrf.mxu0
    %v703 = vadd.f32 %v608, %v702
    %704 = vdwg.mxu0
    %v706 = vsel %vm442, %v530, 0
    %708 = vmatpush.msra.mxu0 0.0
    %709 = vmatpush.msra.mxu0 0.0
    %710 = vmatpush.msra.mxu0 0.0
    %711 = vmatpush.msra.mxu0 0.0
    %712 = vmatpush.msra.mxu0 0.0
    %713 = vmatpush.msra.mxu0 0.0
    %714 = vmatpush.msra.mxu0 0.0
    %715 = vmatpush.msra.mxu0 0.0
    %716 = vmatpush.msra.mxu0 0.0
    %717 = vmatpush.msra.mxu0 0.0
    %718 = vmatpush.msra.mxu0 0.0
    %719 = vmatpush.msra.mxu0 0.0
    %720 = vmatpush.msra.mxu0 0.0
    %721 = vmatpush.msra.mxu0 0.0
    %722 = vmatpush.msra.mxu0 %v232
    %723 = vmatpush.msra.mxu0 %v230
    %724 = vmatmul.f32.gmra.mxu0 %v706
    %v725 = vpop.f32.mrf.mxu0
    %v726 = vadd.f32 %v634, %v725
    %727 = vdwg.mxu0
    %729 = vrot.lane.b32.xlu0 %v680, 8
    %v730 = vpop.permute.xlu0 %729
    %733 = vrot.lane.b32.xlu0 %v703, 16
    %v734 = vpop.permute.xlu0 %733
    %737 = vrot.lane.b32.xlu0 %v726, 24
    %v738 = vpop.permute.xlu0 %737
    %v740 = vsel %vm235, %v657, %v730
    %v741 = vsel %vm442, %v740, %v734
    %vm742 = vcmask 195584
    %v743 = vsel %vm742, %v741, %v738
    %v744 = vld [vmem:[%s4] sm:$0xff]
    %v745 = vld [vmem:[%s4 + $0x8] sm:$0xff]
    %v746 = vld [vmem:[%s4 + $0x10] sm:$0xff]
    %v747 = vld [vmem:[%s4 + $0x18] sm:$0xff]
    %v748 = vld [vmem:[%s5] sm:$0x1]
    %v750 = vperm.slane %v748, 0
    %v753 = vsel %vm81, %v743, 0
    %755 = vmatpush.msra.mxu0 0.0
    %756 = vmatpush.msra.mxu0 0.0
    %757 = vmatpush.msra.mxu0 0.0
    %758 = vmatpush.msra.mxu0 0.0
    %759 = vmatpush.msra.mxu0 0.0
    %760 = vmatpush.msra.mxu0 0.0
    %761 = vmatpush.msra.mxu0 0.0
    %762 = vmatpush.msra.mxu0 0.0
    %763 = vmatpush.msra.mxu0 0.0
    %764 = vmatpush.msra.mxu0 0.0
    %765 = vmatpush.msra.mxu0 0.0
    %766 = vmatpush.msra.mxu0 0.0
    %767 = vmatpush.msra.mxu0 %v747
    %768 = vmatpush.msra.mxu0 %v746
    %769 = vmatpush.msra.mxu0 %v745
    %770 = vmatpush.msra.mxu0 %v744
    %771 = vmatmul.f32.gmra.mxu0 %v753
    %v772 = vpop.f32.mrf.mxu0
    %v773 = vadd.f32 %v750, %v772
    %774 = vdwg.mxu0
    %775 = vst.msk [vmem:[#allocation8] sm:$0xff] %vm81, %v773
    %s776 = smul.u32 8, 1
    %s777 = sshll.u32 %s776, 4
    %778 = dma.done %s120, %s777
    %s779 = sshll.u32 %s776, 4
    %780 = dma.done %s156, %s779
    // Predicated region
    $region132: #{_lambda_.1} parent=1 // pred_check
      _
    $region133: #{_lambda_.1} parent=1 // pred_check_branch
      %782 = sbr.rel (0) target = $region135
    $region134: #{_lambda_.1} parent=1 // pred_region
      %784 = vsyncadd [#allocation9], 0
      %s786 = sshll.u32 [#allocation8], 4
      %s787 = int_to_ptr.vmem [resolvable:$true] %s786
      %s788 = sshll.u32 %s8, 4
      %s789 = int_to_ptr.hbm [resolvable:$true] %s788
      %791 = dma.vmem_to_hbm [thread:$0]  %s787, 128, %s789, [#allocation9]
    $region135: #{_lambda_.1} parent=1 // pred_fallthru
      _
    // Predicated region
    $region136: #{_lambda_.1} parent=1 // pred_check
      _
    $region137: #{_lambda_.1} parent=1 // pred_check_branch
      %793 = sbr.rel (0) target = $region139
    $region138: #{_lambda_.1} parent=1 // pred_region
      %795 = dma.done [#allocation9], 128
    $region139: #{_lambda_.1} parent=1 // pred_fallthru
      _
    %796 = vsyncpa [#allocation9], 1
  %797 = vsyncmov [#allocation6]
  %s798 = vpop.sfrf %797
  %p799 = scmp.eq.s32.totalorder %s798, 0
  %p800 = pneg %p799
  %802 = shalt.err (%p800)
  %s803 = scalar_lea.sflag [#allocation6], 1
  %804 = vsyncmov %s803
  %s805 = vpop.sfrf %804
  %p806 = scmp.eq.s32.totalorder %s805, 0
  %p807 = pneg %p806
  %809 = shalt.err (%p807)
  %s810 = scalar_lea.sflag [#allocation6], 2
  %811 = vsyncmov %s810
  %s812 = vpop.sfrf %811
  %p813 = scmp.eq.s32.totalorder %s812, 0
  %p814 = pneg %p813
  %816 = shalt.err (%p814)
  %s817 = scalar_lea.sflag [#allocation6], 3
  %818 = vsyncmov %s817
  %s819 = vpop.sfrf %818
  %p820 = scmp.eq.s32.totalorder %s819, 0
  %p821 = pneg %p820
  %823 = shalt.err (%p821)

</llo_original>
